<compile_context>
chip_gen: v6e
topology: v6e:2x2x1
jax: 0.10.0
libtpu: 0.0.40
codegen_flags: <defaults>
</compile_context>

<pallas_src>
import jax
import jax.numpy as jnp
from jax import lax
from jax.experimental import pallas as pl
from jax.experimental.pallas import tpu as pltpu

EPS = 1e-5
LANE = 128
SUBLANE = 8
# Above this many (padded) rows the whole-batch fused kernel hands off to the
# batch-tiled pipelined kernel.
MAX_FUSED_ROWS = 2048
# Default batch tile for the pipelined kernel: multiple of 256 so the MXU M
# dimension is full on v6e/v7x (v5e just takes extra M passes per tile).
DEFAULT_TILE_ROWS = 512
# Safe on every generation (v7x has only 64 MiB physical VMEM per TC).
VMEM_LIMIT = 32 * 1024 * 1024


def _round_up(n, m):
    return ((n + m - 1) // m) * m


# --------------------------------------------------------------------------
# Kernels
# --------------------------------------------------------------------------
def _make_fused_kernel(n_valid):
    """Whole-batch-in-VMEM kernel. n_valid = true batch size; rows beyond it
    (added by the wrapper to reach a sublane multiple) are zero padding."""
    inv_n = 1.0 / float(n_valid)

    def kernel(x_ref, w1_ref, bias_ref, w2_ref, o_ref):
        h_pad = w1_ref.shape[1]
        out_pad = w2_ref.shape[1]
        n_rows = x_ref.shape[0]

        b = bias_ref[...]
        b1 = b[0:1, :h_pad]
        b2 = b[1:2, :out_pad]

        x = x_ref[...]
        # bn1: single-pass stats. Zero-padded rows contribute nothing to either
        # sum; divide by the true batch size.
        mu1 = jnp.sum(x, axis=0, keepdims=True) * inv_n
        ex2 = jnp.sum(x * x, axis=0, keepdims=True) * inv_n
        var1 = jnp.maximum(ex2 - mu1 * mu1, 0.0)
        xn1 = (x - mu1) * lax.rsqrt(var1 + EPS)

        # fc1 (+ folded bn1 affine) + tanh: bf16 MXU operands, f32 accumulate.
        h = jnp.tanh(
            jnp.dot(xn1.astype(jnp.bfloat16), w1_ref[...],
                    preferred_element_type=jnp.float32) + b1)

        # bn2: padded rows of h are NOT zero (they see -mu1 and the bias), so
        # mask them out of the statistics when the batch was padded.
        if n_rows != n_valid:
            rows = lax.broadcasted_iota(jnp.int32, (n_rows, 1), 0)
            hm = jnp.where(rows < n_valid, h, 0.0)
        else:
            hm = h
        mu2 = jnp.sum(hm, axis=0, keepdims=True) * inv_n
        eh2 = jnp.sum(hm * hm, axis=0, keepdims=True) * inv_n
        var2 = jnp.maximum(eh2 - mu2 * mu2, 0.0)
        hn = (h - mu2) * lax.rsqrt(var2 + EPS)

        # fc2 (+ folded bn2 affine): lane-dense unmasked store.
        o_ref[...] = jnp.dot(hn.astype(jnp.bfloat16), w2_ref[...],
                             preferred_element_type=jnp.float32) + b2

    return kernel


def _make_tiled_kernel(n_valid, tile_rows, n_rows_total):
    """Batch-tiled 3-phase kernel. Grid = (3 phases, n_tiles); both axes
    'arbitrary'. Weights stay resident; per-feature stats and the full hidden
    activation live in VMEM scratch across grid steps."""
    inv_n = 1.0 / float(n_valid)
    need_mask = n_rows_total != n_valid

    def kernel(x_ref, w1_ref, bias_ref, w2_ref, o_ref, h_scr, st1, st2):
        phase = pl.program_id(0)
        t = pl.program_id(1)
        h_pad = w1_ref.shape[1]
        out_pad = w2_ref.shape[1]
        row0 = pl.multiple_of(t * tile_rows, tile_rows)

        # ---- phase 0: accumulate per-feature sum / sum-of-squares of x ----
        @pl.when(phase == 0)
        def _():
            @pl.when(t == 0)
            def _():
                st1[...] = jnp.zeros_like(st1)

            x = x_ref[...]
            st1[0:1, :] += jnp.sum(x, axis=0, keepdims=True)
            st1[1:2, :] += jnp.sum(x * x, axis=0, keepdims=True)

        # ---- phase 1: finalize bn1 stats, compute h tile, accumulate bn2 ----
        @pl.when(phase == 1)
        def _():
            @pl.when(t == 0)
            def _():
                mu = st1[0:1, :] * inv_n
                var = jnp.maximum(st1[1:2, :] * inv_n - mu * mu, 0.0)
                st1[0:1, :] = mu
                st1[1:2, :] = lax.rsqrt(var + EPS)
                st2[...] = jnp.zeros_like(st2)

            x = x_ref[...]
            b = bias_ref[...]
            xn = (x - st1[0:1, :]) * st1[1:2, :]
            h = jnp.tanh(
                jnp.dot(xn.astype(jnp.bfloat16), w1_ref[...],
                        preferred_element_type=jnp.float32) + b[0:1, :h_pad])
            if need_mask:
                rows = row0 + lax.broadcasted_iota(jnp.int32, (tile_rows, 1), 0)
                hm = jnp.where(rows < n_valid, h, 0.0)
            else:
                hm = h
            st2[0:1, :] += jnp.sum(hm, axis=0, keepdims=True)
            st2[1:2, :] += jnp.sum(hm * hm, axis=0, keepdims=True)
            h_scr[pl.ds(row0, tile_rows), :] = h

        # ---- phase 2: finalize bn2 stats, normalize, fc2, store tile ----
        # (the x tile is still prefetched by the pipeline here but unused;
        #  harmless, it overlaps with compute.)
        @pl.when(phase == 2)
        def _():
            @pl.when(t == 0)
            def _():
                mu = st2[0:1, :] * inv_n
                var = jnp.maximum(st2[1:2, :] * inv_n - mu * mu, 0.0)
                st2[0:1, :] = mu
                st2[1:2, :] = lax.rsqrt(var + EPS)

            b = bias_ref[...]
            h = h_scr[pl.ds(row0, tile_rows), :]
            hn = (h - st2[0:1, :]) * st2[1:2, :]
            o_ref[...] = (jnp.dot(hn.astype(jnp.bfloat16), w2_ref[...],
                                  preferred_element_type=jnp.float32)
                          + b[1:2, :out_pad])

    return kernel


# --------------------------------------------------------------------------
# Parameter prep (run once per parameter set) and jitted forward builder
# --------------------------------------------------------------------------
def prepare_params(params):
    """Fold BN affines into the Linear layers, pad to lane-dense shapes, cast
    matmul operands to bf16 and pack the two bias rows into one array."""
    g1, be1 = params["g1"], params["be1"]          # (1, F_in)
    w1, b1 = params["w1"], params["b1"]            # (F_in, H), (1, H)
    g2, be2 = params["g2"], params["be2"]          # (1, H)
    w2, b2 = params["w2"], params["b2"]            # (H, OUT), (1, OUT)

    f_in, hidden = w1.shape
    out_dim = w2.shape[1]
    h_pad = _round_up(hidden, LANE)
    out_pad = _round_up(out_dim, LANE)
    p = max(h_pad, out_pad)

    # Fold:  (xn * g + be) @ W + b  ==  xn @ (g^T * W) + (be @ W + b).
    # Quantize the folded weights to bf16 first and fold the bias against the
    # de-quantized matrix, so bias and matmul see the same effective weights.
    w1_q = (g1.reshape(-1, 1) * w1).astype(jnp.bfloat16)
    w2_q = (g2.reshape(-1, 1) * w2).astype(jnp.bfloat16)
    b1_eff = (be1 @ w1_q.astype(jnp.float32) + b1).astype(jnp.float32)
    b2_eff = (be2 @ w2_q.astype(jnp.float32) + b2).astype(jnp.float32)

    # Zero-pad to lane-dense shapes (padded lanes contribute exactly zero).
    w1p = jnp.zeros((f_in, h_pad), jnp.bfloat16).at[:, :hidden].set(w1_q)
    w2p = jnp.zeros((h_pad, out_pad), jnp.bfloat16).at[:hidden, :out_dim].set(w2_q)
    bias = (jnp.zeros((2, p), jnp.float32)
            .at[0, :hidden].set(b1_eff[0])
            .at[1, :out_dim].set(b2_eff[0]))

    prepped = dict(w1=w1p, w2=w2p, bias=bias)
    dims = dict(f_in=f_in, out_dim=out_dim, h_pad=h_pad, out_pad=out_pad)
    return prepped, dims


def make_forward(params, *, block_rows=None):
    """Build a jitted forward fn for one EmoNet0 parameter set.

    block_rows=None -> auto: whole-batch fused kernel for small batches, the
    batch-tiled pipelined kernel (tile=DEFAULT_TILE_ROWS) for large ones.
    block_rows=int  -> always use the tiled kernel with that tile size.
    """
    prepped, dims = prepare_params(params)        # runs once, cached in closure
    w1p, w2p, bias = prepped["w1"], prepped["w2"], prepped["bias"]
    f_in, out_dim = dims["f_in"], dims["out_dim"]
    h_pad, out_pad = dims["h_pad"], dims["out_pad"]

    def _fused(x, n_valid):
        n_rows = _round_up(n_valid, SUBLANE)
        if n_rows != n_valid:
            x = jnp.pad(x, ((0, n_rows - n_valid), (0, 0)))
        vmem = pl.BlockSpec(memory_space=pltpu.MemorySpace.VMEM)
        out = pl.pallas_call(
            _make_fused_kernel(n_valid),
            out_shape=jax.ShapeDtypeStruct((n_rows, out_pad), jnp.float32),
            in_specs=[vmem] * 4,
            out_specs=vmem,
            compiler_params=pltpu.CompilerParams(vmem_limit_bytes=VMEM_LIMIT),
        )(x, w1p, bias, w2p)
        return out[:n_valid, :out_dim]

    def _tiled(x, n_valid, tile_rows):
        assert tile_rows % SUBLANE == 0
        n_rows = _round_up(n_valid, tile_rows)
        n_tiles = n_rows // tile_rows
        if n_rows != n_valid:
            x = jnp.pad(x, ((0, n_rows - n_valid), (0, 0)))
        # Keep the resident footprint comfortably under v7x's 64 MiB VMEM.
        h_bytes = n_rows * h_pad * 4
        tile_bytes = 2 * tile_rows * (f_in + out_pad) * 4
        assert h_bytes + tile_bytes <= 24 * 1024 * 1024, (
            "batch too large for the VMEM-resident hidden-activation scratch")
        # TODO(synk): beyond that budget, spill h to an HBM intermediate
        # (extra output) instead of VMEM scratch, and stream x as bf16.
        grid_spec = pltpu.PrefetchScalarGridSpec(
            num_scalar_prefetch=0,
            grid=(3, n_tiles),
            in_specs=[
                pl.BlockSpec((tile_rows, f_in), lambda p, t: (t, 0)),
                pl.BlockSpec((f_in, h_pad), lambda p, t: (0, 0)),     # resident
                pl.BlockSpec(bias.shape, lambda p, t: (0, 0)),        # resident
                pl.BlockSpec((h_pad, out_pad), lambda p, t: (0, 0)),  # resident
            ],
            out_specs=pl.BlockSpec((tile_rows, out_pad), lambda p, t: (t, 0)),
            scratch_shapes=[
                pltpu.VMEM((n_rows, h_pad), jnp.float32),   # hidden activations
                pltpu.VMEM((2, f_in), jnp.float32),         # bn1 sum / sumsq
                pltpu.VMEM((2, h_pad), jnp.float32),        # bn2 sum / sumsq
            ])
        out = pl.pallas_call(
            _make_tiled_kernel(n_valid, tile_rows, n_rows),
            out_shape=jax.ShapeDtypeStruct((n_rows, out_pad), jnp.float32),
            grid_spec=grid_spec,
            compiler_params=pltpu.CompilerParams(
                dimension_semantics=("arbitrary", "arbitrary"),
                vmem_limit_bytes=VMEM_LIMIT),
        )(x, w1p, bias, w2p)
        return out[:n_valid, :out_dim]

    @jax.jit
    def forward(x):
        x = x.astype(jnp.float32)
        assert x.shape[1] == f_in
        n_valid = x.shape[0]
        if block_rows is not None:
            return _tiled(x, n_valid, block_rows)
        if _round_up(n_valid, SUBLANE) <= MAX_FUSED_ROWS:
            return _fused(x, n_valid)
        return _tiled(x, n_valid, DEFAULT_TILE_ROWS)

    return forward


# --------------------------------------------------------------------------
# Deterministic synthetic params + pure-JAX reference
# --------------------------------------------------------------------------
def init_params(key, input_size=163, hidden_size=32, output_size=7):
    """Synthetic parameters matching EmoNet0's shapes. Linear weights are kept
    pre-transposed to (in, out); BN gamma/beta are randomized (instead of
    PyTorch's 1/0 init) so the affine-folding path is actually exercised."""
    k1, k2, k3, k4, k5, k6, k7, k8 = jax.random.split(key, 8)
    lim1 = 1.0 / (input_size ** 0.5)
    lim2 = 1.0 / (hidden_size ** 0.5)
    return {
        "g1":  jax.random.uniform(k5, (1, input_size), jnp.float32, 0.5, 1.5),
        "be1": 0.1 * jax.random.normal(k6, (1, input_size), jnp.float32),
        "w1": jax.random.uniform(k1, (input_size, hidden_size), jnp.float32, -lim1, lim1),
        "b1": jax.random.uniform(k2, (1, hidden_size), jnp.float32, -lim1, lim1),
        "g2":  jax.random.uniform(k7, (1, hidden_size), jnp.float32, 0.5, 1.5),
        "be2": 0.1 * jax.random.normal(k8, (1, hidden_size), jnp.float32),
        "w2": jax.random.uniform(k3, (hidden_size, output_size), jnp.float32, -lim2, lim2),
        "b2": jax.random.uniform(k4, (1, output_size), jnp.float32, -lim2, lim2),
    }


def _reference(x, p):
    """Pure-JAX f32 reference (training-mode BN, biased variance)."""
    def bn(v, g, b):
        mu = jnp.mean(v, axis=0, keepdims=True)
        var = jnp.mean((v - mu) ** 2, axis=0, keepdims=True)
        return (v - mu) / jnp.sqrt(var + EPS) * g + b

    h = jnp.tanh(bn(x, p["g1"], p["be1"]) @ p["w1"] + p["b1"])
    return bn(h, p["g2"], p["be2"]) @ p["w2"] + p["b2"]


if __name__ == "__main__":
    key = jax.random.PRNGKey(0)
    kp, kx1, kx2, kx3 = jax.random.split(key, 4)

    IN, H, OUT = 163, 32, 7
    params = init_params(kp, input_size=IN, hidden_size=H, output_size=OUT)

    # Auto path: whole-batch fused kernel. B=256 fills the 256-wide MXU M
    # dimension on v6e/v7x (two M passes on v5e).
    fwd = make_forward(params)
    x1 = jax.random.normal(kx1, (256, IN), jnp.float32)
    out1 = jax.block_until_ready(fwd(x1))
    ref1 = _reference(x1, params)
    assert out1.shape == (256, OUT)
    assert jnp.allclose(out1, ref1, atol=5e-2, rtol=5e-2), "fused mismatch"

    # Batch not a multiple of 8: exercises row padding + in-kernel masking.
    x2 = jax.random.normal(kx2, (100, IN), jnp.float32)
    out2 = jax.block_until_ready(fwd(x2))
    ref2 = _reference(x2, params)
    assert out2.shape == (100, OUT)
    assert jnp.allclose(out2, ref2, atol=5e-2, rtol=5e-2), "padded-batch mismatch"

    # Batch-tiled pipelined path (forced small tile so it is exercised here;
    # auto-selected for batches above MAX_FUSED_ROWS rows).
    fwd_tiled = make_forward(params, block_rows=256)
    x3 = jax.random.normal(kx3, (1000, IN), jnp.float32)
    out3 = jax.block_until_ready(fwd_tiled(x3))
    ref3 = _reference(x3, params)
    assert out3.shape == (1000, OUT)
    assert jnp.allclose(out3, ref3, atol=5e-2, rtol=5e-2), "tiled mismatch"

    print("KERNEL_OK")
</pallas_src>

<mosaic_0001>
module attributes {stable_mosaic.version = 11 : i64} {
  func.func @kernel(%arg0: memref<256x163xf32, #tpu.memory_space<vmem>>, %arg1: memref<163x128xbf16, #tpu.memory_space<vmem>>, %arg2: memref<2x128xf32, #tpu.memory_space<vmem>>, %arg3: memref<128x128xbf16, #tpu.memory_space<vmem>>, %arg4: memref<256x128xf32, #tpu.memory_space<vmem>>) attributes {dimension_semantics = [], scalar_prefetch = 0 : i64, scratch_operands = 0 : i64, tpu.core_type = #tpu.core_type<tc>} {
    %c0 = arith.constant 0 : index
    %c0_0 = arith.constant 0 : index
    %0 = vector.load %arg2[%c0, %c0_0] : memref<2x128xf32, #tpu.memory_space<vmem>>, vector<2x128xf32>
    %1 = vector.extract_strided_slice %0 {offsets = [0, 0], sizes = [1, 128], strides = [1, 1]} : vector<2x128xf32> to vector<1x128xf32>
    %2 = vector.extract_strided_slice %0 {offsets = [1, 0], sizes = [1, 128], strides = [1, 1]} : vector<2x128xf32> to vector<1x128xf32>
    %c0_1 = arith.constant 0 : index
    %c0_2 = arith.constant 0 : index
    %3 = vector.load %arg0[%c0_1, %c0_2] : memref<256x163xf32, #tpu.memory_space<vmem>>, vector<256x163xf32>
    %cst = arith.constant dense<0.000000e+00> : vector<163xf32>
    %4 = vector.multi_reduction <add>, %3, %cst [0] : vector<256x163xf32> to vector<163xf32>
    %5 = vector.shape_cast %4 : vector<163xf32> to vector<1x163xf32>
    %cst_3 = arith.constant 3.906250e-03 : f32
    %6 = vector.broadcast %cst_3 : f32 to vector<1x163xf32>
    %7 = arith.mulf %5, %6 : vector<1x163xf32>
    %8 = arith.mulf %3, %3 : vector<256x163xf32>
    %cst_4 = arith.constant dense<0.000000e+00> : vector<163xf32>
    %9 = vector.multi_reduction <add>, %8, %cst_4 [0] : vector<256x163xf32> to vector<163xf32>
    %10 = vector.shape_cast %9 : vector<163xf32> to vector<1x163xf32>
    %cst_5 = arith.constant 3.906250e-03 : f32
    %11 = vector.broadcast %cst_5 : f32 to vector<1x163xf32>
    %12 = arith.mulf %10, %11 : vector<1x163xf32>
    %13 = arith.mulf %7, %7 : vector<1x163xf32>
    %14 = arith.subf %12, %13 : vector<1x163xf32>
    %cst_6 = arith.constant 0.000000e+00 : f32
    %15 = vector.broadcast %cst_6 : f32 to vector<1x163xf32>
    %16 = arith.maximumf %14, %15 : vector<1x163xf32>
    %17 = vector.broadcast %7 : vector<1x163xf32> to vector<256x163xf32>
    %18 = arith.subf %3, %17 : vector<256x163xf32>
    %cst_7 = arith.constant 9.99999974E-6 : f32
    %19 = vector.broadcast %cst_7 : f32 to vector<1x163xf32>
    %20 = arith.addf %16, %19 : vector<1x163xf32>
    %21 = math.rsqrt %20 : vector<1x163xf32>
    %22 = vector.broadcast %21 : vector<1x163xf32> to vector<256x163xf32>
    %23 = arith.mulf %18, %22 : vector<256x163xf32>
    %24 = arith.truncf %23 : vector<256x163xf32> to vector<256x163xbf16>
    %c0_8 = arith.constant 0 : index
    %c0_9 = arith.constant 0 : index
    %25 = vector.load %arg1[%c0_8, %c0_9] : memref<163x128xbf16, #tpu.memory_space<vmem>>, vector<163x128xbf16>
    %cst_10 = arith.constant dense<0.000000e+00> : vector<256x128xf32>
    %26 = tpu.matmul %24, %25, %cst_10 {dimension_numbers = #tpu.dot_dimension_numbers<[1], [0], [0], [1], [0, 0, 1, 1], [], []>} : vector<256x163xbf16>, vector<163x128xbf16>, vector<256x128xf32> -> vector<256x128xf32>
    %27 = vector.broadcast %1 : vector<1x128xf32> to vector<256x128xf32>
    %28 = arith.addf %26, %27 : vector<256x128xf32>
    %29 = math.tanh %28 : vector<256x128xf32>
    %cst_11 = arith.constant dense<0.000000e+00> : vector<128xf32>
    %30 = vector.multi_reduction <add>, %29, %cst_11 [0] : vector<256x128xf32> to vector<128xf32>
    %31 = vector.shape_cast %30 : vector<128xf32> to vector<1x128xf32>
    %cst_12 = arith.constant 3.906250e-03 : f32
    %32 = vector.broadcast %cst_12 : f32 to vector<1x128xf32>
    %33 = arith.mulf %31, %32 : vector<1x128xf32>
    %34 = arith.mulf %29, %29 : vector<256x128xf32>
    %cst_13 = arith.constant dense<0.000000e+00> : vector<128xf32>
    %35 = vector.multi_reduction <add>, %34, %cst_13 [0] : vector<256x128xf32> to vector<128xf32>
    %36 = vector.shape_cast %35 : vector<128xf32> to vector<1x128xf32>
    %cst_14 = arith.constant 3.906250e-03 : f32
    %37 = vector.broadcast %cst_14 : f32 to vector<1x128xf32>
    %38 = arith.mulf %36, %37 : vector<1x128xf32>
    %39 = arith.mulf %33, %33 : vector<1x128xf32>
    %40 = arith.subf %38, %39 : vector<1x128xf32>
    %cst_15 = arith.constant 0.000000e+00 : f32
    %41 = vector.broadcast %cst_15 : f32 to vector<1x128xf32>
    %42 = arith.maximumf %40, %41 : vector<1x128xf32>
    %43 = vector.broadcast %33 : vector<1x128xf32> to vector<256x128xf32>
    %44 = arith.subf %29, %43 : vector<256x128xf32>
    %cst_16 = arith.constant 9.99999974E-6 : f32
    %45 = vector.broadcast %cst_16 : f32 to vector<1x128xf32>
    %46 = arith.addf %42, %45 : vector<1x128xf32>
    %47 = math.rsqrt %46 : vector<1x128xf32>
    %48 = vector.broadcast %47 : vector<1x128xf32> to vector<256x128xf32>
    %49 = arith.mulf %44, %48 : vector<256x128xf32>
    %50 = arith.truncf %49 : vector<256x128xf32> to vector<256x128xbf16>
    %c0_17 = arith.constant 0 : index
    %c0_18 = arith.constant 0 : index
    %51 = vector.load %arg3[%c0_17, %c0_18] : memref<128x128xbf16, #tpu.memory_space<vmem>>, vector<128x128xbf16>
    %cst_19 = arith.constant dense<0.000000e+00> : vector<256x128xf32>
    %52 = tpu.matmul %50, %51, %cst_19 {dimension_numbers = #tpu.dot_dimension_numbers<[1], [0], [0], [1], [0, 0, 1, 1], [], []>} : vector<256x128xbf16>, vector<128x128xbf16>, vector<256x128xf32> -> vector<256x128xf32>
    %53 = vector.broadcast %2 : vector<1x128xf32> to vector<256x128xf32>
    %54 = arith.addf %52, %53 : vector<256x128xf32>
    %c0_20 = arith.constant 0 : index
    %c0_21 = arith.constant 0 : index
    %55 = vector.load %arg4[%c0_20, %c0_21] : memref<256x128xf32, #tpu.memory_space<vmem>>, vector<256x128xf32>
    tpu.vector_store %arg4[%c0_20, %c0_21], %54 {strides = array<i32>} : memref<256x128xf32, #tpu.memory_space<vmem>>, vector<256x128xf32>,
    return
  }
}

</mosaic_0001>

<llo_original>
// kernel: forward.1
$region0: #{forward.1}
  #allocation0 [shape = 'u32[]', space=smem, size = 0x4, offset = 0x4, fixed_abs, tag = 'smem constant byte address 0x4 - core index']
  #allocation1 [shape = 'u32[144,128]{1,0:T(1,128)}', space=vmem, size = 0x12000, scoped, tag = 'internal scratch']
  %s0 = inlined_call_operand.vmem [shape: f32[256,163], index: 0, kind: input, shape index: {}]
  %s1 = inlined_call_operand.vmem [shape: bf16[163,128], index: 1, kind: input, shape index: {}]
  %s2 = inlined_call_operand.vmem [shape: f32[2,128], index: 2, kind: input, shape index: {}]
  %s3 = inlined_call_operand.vmem [shape: bf16[128,128], index: 3, kind: input, shape index: {}]
  %s4 = inlined_call_operand.vmem [shape: f32[256,128], index: 4, kind: output, shape index: {}]
  %s5 = sld [smem:[#allocation0]]
  $region26: #{forward.1} parent=0
    _
  %s7 = ssub.s32 1, %s5
  %s8 = scalar_select 0, %s7, %s5
  // Predicated region
  $region2: #{forward.1} parent=0 // pred_check
    _
  $region3: #{forward.1} parent=0 // pred_check_branch
    %10 = sbr.rel (0) target = $region5
  $region4: #{forward.1} parent=0 // pred_region
    _
  $region5: #{forward.1} parent=0 // pred_fallthru
    _
  // Predicated region
  $region6: #{forward.1} parent=0 // pred_check
    _
  $region7: #{forward.1} parent=0 // pred_check_branch
    %12 = sbr.rel (0) target = $region9
  $region8: #{forward.1} parent=0 // pred_region
    _
  $region9: #{forward.1} parent=0 // pred_fallthru
    _
  // Predicated region
  $region10: #{forward.1} parent=0 // pred_check
    _
  $region11: #{forward.1} parent=0 // pred_check_branch
    %14 = sbr.rel (0) target = $region13
  $region12: #{forward.1} parent=0 // pred_region
    _
  $region13: #{forward.1} parent=0 // pred_fallthru
    _
  // Predicated region
  $region14: #{forward.1} parent=0 // pred_check
    _
  $region15: #{forward.1} parent=0 // pred_check_branch
    %16 = sbr.rel (0) target = $region17
  $region16: #{forward.1} parent=0 // pred_region
    _
  $region17: #{forward.1} parent=0 // pred_fallthru
    _
  %v18 = vld [vmem:[%s2] sm:$0x3]
  %v19 = vld [vmem:[%s0] sm:$0xff]
  %v20 = vld [vmem:[%s0 + $0x8] sm:$0xff]
  %v21 = vld [vmem:[%s0 + $0x10] sm:$0xff]
  %v22 = vld [vmem:[%s0 + $0x18] sm:$0xff]
  %v23 = vld [vmem:[%s0 + $0x20] sm:$0xff]
  %v24 = vld [vmem:[%s0 + $0x28] sm:$0xff]
  %v25 = vld [vmem:[%s0 + $0x30] sm:$0xff]
  %v26 = vld [vmem:[%s0 + $0x38] sm:$0xff]
  %v27 = vld [vmem:[%s0 + $0x40] sm:$0xff]
  %v28 = vld [vmem:[%s0 + $0x48] sm:$0xff]
  %v29 = vld [vmem:[%s0 + $0x50] sm:$0xff]
  %v30 = vld [vmem:[%s0 + $0x58] sm:$0xff]
  %v31 = vld [vmem:[%s0 + $0x60] sm:$0xff]
  %v32 = vld [vmem:[%s0 + $0x68] sm:$0xff]
  %v33 = vld [vmem:[%s0 + $0x70] sm:$0xff]
  %v34 = vld [vmem:[%s0 + $0x78] sm:$0xff]
  %v35 = vld [vmem:[%s0 + $0x80] sm:$0xff]
  %v36 = vld [vmem:[%s0 + $0x88] sm:$0xff]
  %v37 = vld [vmem:[%s0 + $0x90] sm:$0xff]
  %v38 = vld [vmem:[%s0 + $0x98] sm:$0xff]
  %v39 = vld [vmem:[%s0 + $0xa0] sm:$0xff]
  %v40 = vld [vmem:[%s0 + $0xa8] sm:$0xff]
  %v41 = vld [vmem:[%s0 + $0xb0] sm:$0xff]
  %v42 = vld [vmem:[%s0 + $0xb8] sm:$0xff]
  %v43 = vld [vmem:[%s0 + $0xc0] sm:$0xff]
  %v44 = vld [vmem:[%s0 + $0xc8] sm:$0xff]
  %v45 = vld [vmem:[%s0 + $0xd0] sm:$0xff]
  %v46 = vld [vmem:[%s0 + $0xd8] sm:$0xff]
  %v47 = vld [vmem:[%s0 + $0xe0] sm:$0xff]
  %v48 = vld [vmem:[%s0 + $0xe8] sm:$0xff]
  %v49 = vld [vmem:[%s0 + $0xf0] sm:$0xff]
  %v50 = vld [vmem:[%s0 + $0xf8] sm:$0xff]
  %v51 = vld [vmem:[%s0 + $0x100] sm:$0xff]
  %v52 = vld [vmem:[%s0 + $0x108] sm:$0xff]
  %v53 = vld [vmem:[%s0 + $0x110] sm:$0xff]
  %v54 = vld [vmem:[%s0 + $0x118] sm:$0xff]
  %v55 = vld [vmem:[%s0 + $0x120] sm:$0xff]
  %v56 = vld [vmem:[%s0 + $0x128] sm:$0xff]
  %v57 = vld [vmem:[%s0 + $0x130] sm:$0xff]
  %v58 = vld [vmem:[%s0 + $0x138] sm:$0xff]
  %v59 = vld [vmem:[%s0 + $0x140] sm:$0xff]
  %v60 = vld [vmem:[%s0 + $0x148] sm:$0xff]
  %v61 = vld [vmem:[%s0 + $0x150] sm:$0xff]
  %v62 = vld [vmem:[%s0 + $0x158] sm:$0xff]
  %v63 = vld [vmem:[%s0 + $0x160] sm:$0xff]
  %v64 = vld [vmem:[%s0 + $0x168] sm:$0xff]
  %v65 = vld [vmem:[%s0 + $0x170] sm:$0xff]
  %v66 = vld [vmem:[%s0 + $0x178] sm:$0xff]
  %v67 = vld [vmem:[%s0 + $0x180] sm:$0xff]
  %v68 = vld [vmem:[%s0 + $0x188] sm:$0xff]
  %v69 = vld [vmem:[%s0 + $0x190] sm:$0xff]
  %v70 = vld [vmem:[%s0 + $0x198] sm:$0xff]
  %v71 = vld [vmem:[%s0 + $0x1a0] sm:$0xff]
  %v72 = vld [vmem:[%s0 + $0x1a8] sm:$0xff]
  %v73 = vld [vmem:[%s0 + $0x1b0] sm:$0xff]
  %v74 = vld [vmem:[%s0 + $0x1b8] sm:$0xff]
  %v75 = vld [vmem:[%s0 + $0x1c0] sm:$0xff]
  %v76 = vld [vmem:[%s0 + $0x1c8] sm:$0xff]
  %v77 = vld [vmem:[%s0 + $0x1d0] sm:$0xff]
  %v78 = vld [vmem:[%s0 + $0x1d8] sm:$0xff]
  %v79 = vld [vmem:[%s0 + $0x1e0] sm:$0xff]
  %v80 = vld [vmem:[%s0 + $0x1e8] sm:$0xff]
  %v81 = vld [vmem:[%s0 + $0x1f0] sm:$0xff]
  %v82 = vld [vmem:[%s0 + $0x1f8] sm:$0xff]
  %v83 = vadd.f32 %v19, %v21
  %v84 = vadd.f32 %v83, %v23
  %v85 = vadd.f32 %v84, %v25
  %v86 = vadd.f32 %v85, %v27
  %v87 = vadd.f32 %v86, %v29
  %v88 = vadd.f32 %v87, %v31
  %v89 = vadd.f32 %v88, %v33
  %v90 = vadd.f32 %v89, %v35
  %v91 = vadd.f32 %v90, %v37
  %v92 = vadd.f32 %v91, %v39
  %v93 = vadd.f32 %v92, %v41
  %v94 = vadd.f32 %v93, %v43
  %v95 = vadd.f32 %v94, %v45
  %v96 = vadd.f32 %v95, %v47
  %v97 = vadd.f32 %v96, %v49
  %v98 = vadd.f32 %v97, %v51
  %v99 = vadd.f32 %v98, %v53
  %v100 = vadd.f32 %v99, %v55
  %v101 = vadd.f32 %v100, %v57
  %v102 = vadd.f32 %v101, %v59
  %v103 = vadd.f32 %v102, %v61
  %v104 = vadd.f32 %v103, %v63
  %v105 = vadd.f32 %v104, %v65
  %v106 = vadd.f32 %v105, %v67
  %v107 = vadd.f32 %v106, %v69
  %v108 = vadd.f32 %v107, %v71
  %v109 = vadd.f32 %v108, %v73
  %v110 = vadd.f32 %v109, %v75
  %v111 = vadd.f32 %v110, %v77
  %v112 = vadd.f32 %v111, %v79
  %v113 = vadd.f32 %v112, %v81
  %v114 = vrot.slane %v113, 4
  %v115 = vadd.f32 %v113, %v114
  %v116 = vrot.slane %v115, 2
  %v117 = vadd.f32 %v115, %v116
  %v118 = vrot.slane %v117, 1
  %v119 = vadd.f32 %v117, %v118
  %vm120 = vcmask 285696
  %v121 = vsel %vm120, %v20, 0.0
  %v122 = vsel %vm120, %v22, 0.0
  %v123 = vadd.f32 %v121, %v122
  %v124 = vsel %vm120, %v24, 0.0
  %v125 = vadd.f32 %v123, %v124
  %v126 = vsel %vm120, %v26, 0.0
  %v127 = vadd.f32 %v125, %v126
  %v128 = vsel %vm120, %v28, 0.0
  %v129 = vadd.f32 %v127, %v128
  %v130 = vsel %vm120, %v30, 0.0
  %v131 = vadd.f32 %v129, %v130
  %v132 = vsel %vm120, %v32, 0.0
  %v133 = vadd.f32 %v131, %v132
  %v134 = vsel %vm120, %v34, 0.0
  %v135 = vadd.f32 %v133, %v134
  %v136 = vsel %vm120, %v36, 0.0
  %v137 = vadd.f32 %v135, %v136
  %v138 = vsel %vm120, %v38, 0.0
  %v139 = vadd.f32 %v137, %v138
  %v140 = vsel %vm120, %v40, 0.0
  %v141 = vadd.f32 %v139, %v140
  %v142 = vsel %vm120, %v42, 0.0
  %v143 = vadd.f32 %v141, %v142
  %v144 = vsel %vm120, %v44, 0.0
  %v145 = vadd.f32 %v143, %v144
  %v146 = vsel %vm120, %v46, 0.0
  %v147 = vadd.f32 %v145, %v146
  %v148 = vsel %vm120, %v48, 0.0
  %v149 = vadd.f32 %v147, %v148
  %v150 = vsel %vm120, %v50, 0.0
  %v151 = vadd.f32 %v149, %v150
  %v152 = vsel %vm120, %v52, 0.0
  %v153 = vadd.f32 %v151, %v152
  %v154 = vsel %vm120, %v54, 0.0
  %v155 = vadd.f32 %v153, %v154
  %v156 = vsel %vm120, %v56, 0.0
  %v157 = vadd.f32 %v155, %v156
  %v158 = vsel %vm120, %v58, 0.0
  %v159 = vadd.f32 %v157, %v158
  %v160 = vsel %vm120, %v60, 0.0
  %v161 = vadd.f32 %v159, %v160
  %v162 = vsel %vm120, %v62, 0.0
  %v163 = vadd.f32 %v161, %v162
  %v164 = vsel %vm120, %v64, 0.0
  %v165 = vadd.f32 %v163, %v164
  %v166 = vsel %vm120, %v66, 0.0
  %v167 = vadd.f32 %v165, %v166
  %v168 = vsel %vm120, %v68, 0.0
  %v169 = vadd.f32 %v167, %v168
  %v170 = vsel %vm120, %v70, 0.0
  %v171 = vadd.f32 %v169, %v170
  %v172 = vsel %vm120, %v72, 0.0
  %v173 = vadd.f32 %v171, %v172
  %v174 = vsel %vm120, %v74, 0.0
  %v175 = vadd.f32 %v173, %v174
  %v176 = vsel %vm120, %v76, 0.0
  %v177 = vadd.f32 %v175, %v176
  %v178 = vsel %vm120, %v78, 0.0
  %v179 = vadd.f32 %v177, %v178
  %v180 = vsel %vm120, %v80, 0.0
  %v181 = vadd.f32 %v179, %v180
  %v182 = vsel %vm120, %v82, 0.0
  %v183 = vadd.f32 %v181, %v182
  %v184 = vrot.slane %v183, 4
  %v185 = vadd.f32 %v183, %v184
  %v186 = vrot.slane %v185, 2
  %v187 = vadd.f32 %v185, %v186
  %v188 = vrot.slane %v187, 1
  %v189 = vadd.f32 %v187, %v188
  %v190 = vmul.f32 %v119, 0.00390625
  %v191 = vmul.f32 %v189, 0.00390625
  %v192 = vmul.f32 %v19, %v19
  %v193 = vmul.f32 %v20, %v20
  %v194 = vmul.f32 %v21, %v21
  %v195 = vmul.f32 %v22, %v22
  %v196 = vmul.f32 %v23, %v23
  %v197 = vmul.f32 %v24, %v24
  %v198 = vmul.f32 %v25, %v25
  %v199 = vmul.f32 %v26, %v26
  %v200 = vmul.f32 %v27, %v27
  %v201 = vmul.f32 %v28, %v28
  %v202 = vmul.f32 %v29, %v29
  %v203 = vmul.f32 %v30, %v30
  %v204 = vmul.f32 %v31, %v31
  %v205 = vmul.f32 %v32, %v32
  %v206 = vmul.f32 %v33, %v33
  %v207 = vmul.f32 %v34, %v34
  %v208 = vmul.f32 %v35, %v35
  %v209 = vmul.f32 %v36, %v36
  %v210 = vmul.f32 %v37, %v37
  %v211 = vmul.f32 %v38, %v38
  %v212 = vmul.f32 %v39, %v39
  %v213 = vmul.f32 %v40, %v40
  %v214 = vmul.f32 %v41, %v41
  %v215 = vmul.f32 %v42, %v42
  %v216 = vmul.f32 %v43, %v43
  %v217 = vmul.f32 %v44, %v44
  %v218 = vmul.f32 %v45, %v45
  %v219 = vmul.f32 %v46, %v46
  %v220 = vmul.f32 %v47, %v47
  %v221 = vmul.f32 %v48, %v48
  %v222 = vmul.f32 %v49, %v49
  %v223 = vmul.f32 %v50, %v50
  %v224 = vmul.f32 %v51, %v51
  %v225 = vmul.f32 %v52, %v52
  %v226 = vmul.f32 %v53, %v53
  %v227 = vmul.f32 %v54, %v54
  %v228 = vmul.f32 %v55, %v55
  %v229 = vmul.f32 %v56, %v56
  %v230 = vmul.f32 %v57, %v57
  %v231 = vmul.f32 %v58, %v58
  %v232 = vmul.f32 %v59, %v59
  %v233 = vmul.f32 %v60, %v60
  %v234 = vmul.f32 %v61, %v61
  %v235 = vmul.f32 %v62, %v62
  %v236 = vmul.f32 %v63, %v63
  %v237 = vmul.f32 %v64, %v64
  %v238 = vmul.f32 %v65, %v65
  %v239 = vmul.f32 %v66, %v66
  %v240 = vmul.f32 %v67, %v67
  %v241 = vmul.f32 %v68, %v68
  %v242 = vmul.f32 %v69, %v69
  %v243 = vmul.f32 %v70, %v70
  %v244 = vmul.f32 %v71, %v71
  %v245 = vmul.f32 %v72, %v72
  %v246 = vmul.f32 %v73, %v73
  %v247 = vmul.f32 %v74, %v74
  %v248 = vmul.f32 %v75, %v75
  %v249 = vmul.f32 %v76, %v76
  %v250 = vmul.f32 %v77, %v77
  %v251 = vmul.f32 %v78, %v78
  %v252 = vmul.f32 %v79, %v79
  %v253 = vmul.f32 %v80, %v80
  %v254 = vmul.f32 %v81, %v81
  %v255 = vmul.f32 %v82, %v82
  %v256 = vadd.f32 %v192, %v194
  %v257 = vadd.f32 %v256, %v196
  %v258 = vadd.f32 %v257, %v198
  %v259 = vadd.f32 %v258, %v200
  %v260 = vadd.f32 %v259, %v202
  %v261 = vadd.f32 %v260, %v204
  %v262 = vadd.f32 %v261, %v206
  %v263 = vadd.f32 %v262, %v208
  %v264 = vadd.f32 %v263, %v210
  %v265 = vadd.f32 %v264, %v212
  %v266 = vadd.f32 %v265, %v214
  %v267 = vadd.f32 %v266, %v216
  %v268 = vadd.f32 %v267, %v218
  %v269 = vadd.f32 %v268, %v220
  %v270 = vadd.f32 %v269, %v222
  %v271 = vadd.f32 %v270, %v224
  %v272 = vadd.f32 %v271, %v226
  %v273 = vadd.f32 %v272, %v228
  %v274 = vadd.f32 %v273, %v230
  %v275 = vadd.f32 %v274, %v232
  %v276 = vadd.f32 %v275, %v234
  %v277 = vadd.f32 %v276, %v236
  %v278 = vadd.f32 %v277, %v238
  %v279 = vadd.f32 %v278, %v240
  %v280 = vadd.f32 %v279, %v242
  %v281 = vadd.f32 %v280, %v244
  %v282 = vadd.f32 %v281, %v246
  %v283 = vadd.f32 %v282, %v248
  %v284 = vadd.f32 %v283, %v250
  %v285 = vadd.f32 %v284, %v252
  %v286 = vadd.f32 %v285, %v254
  %v287 = vrot.slane %v286, 4
  %v288 = vadd.f32 %v286, %v287
  %v289 = vrot.slane %v288, 2
  %v290 = vadd.f32 %v288, %v289
  %v291 = vrot.slane %v290, 1
  %v292 = vadd.f32 %v290, %v291
  %v293 = vsel %vm120, %v193, 0.0
  %v294 = vsel %vm120, %v195, 0.0
  %v295 = vadd.f32 %v293, %v294
  %v296 = vsel %vm120, %v197, 0.0
  %v297 = vadd.f32 %v295, %v296
  %v298 = vsel %vm120, %v199, 0.0
  %v299 = vadd.f32 %v297, %v298
  %v300 = vsel %vm120, %v201, 0.0
  %v301 = vadd.f32 %v299, %v300
  %v302 = vsel %vm120, %v203, 0.0
  %v303 = vadd.f32 %v301, %v302
  %v304 = vsel %vm120, %v205, 0.0
  %v305 = vadd.f32 %v303, %v304
  %v306 = vsel %vm120, %v207, 0.0
  %v307 = vadd.f32 %v305, %v306
  %v308 = vsel %vm120, %v209, 0.0
  %v309 = vadd.f32 %v307, %v308
  %v310 = vsel %vm120, %v211, 0.0
  %v311 = vadd.f32 %v309, %v310
  %v312 = vsel %vm120, %v213, 0.0
  %v313 = vadd.f32 %v311, %v312
  %v314 = vsel %vm120, %v215, 0.0
  %v315 = vadd.f32 %v313, %v314
  %v316 = vsel %vm120, %v217, 0.0
  %v317 = vadd.f32 %v315, %v316
  %v318 = vsel %vm120, %v219, 0.0
  %v319 = vadd.f32 %v317, %v318
  %v320 = vsel %vm120, %v221, 0.0
  %v321 = vadd.f32 %v319, %v320
  %v322 = vsel %vm120, %v223, 0.0
  %v323 = vadd.f32 %v321, %v322
  %v324 = vsel %vm120, %v225, 0.0
  %v325 = vadd.f32 %v323, %v324
  %v326 = vsel %vm120, %v227, 0.0
  %v327 = vadd.f32 %v325, %v326
  %v328 = vsel %vm120, %v229, 0.0
  %v329 = vadd.f32 %v327, %v328
  %v330 = vsel %vm120, %v231, 0.0
  %v331 = vadd.f32 %v329, %v330
  %v332 = vsel %vm120, %v233, 0.0
  %v333 = vadd.f32 %v331, %v332
  %v334 = vsel %vm120, %v235, 0.0
  %v335 = vadd.f32 %v333, %v334
  %v336 = vsel %vm120, %v237, 0.0
  %v337 = vadd.f32 %v335, %v336
  %v338 = vsel %vm120, %v239, 0.0
  %v339 = vadd.f32 %v337, %v338
  %v340 = vsel %vm120, %v241, 0.0
  %v341 = vadd.f32 %v339, %v340
  %v342 = vsel %vm120, %v243, 0.0
  %v343 = vadd.f32 %v341, %v342
  %v344 = vsel %vm120, %v245, 0.0
  %v345 = vadd.f32 %v343, %v344
  %v346 = vsel %vm120, %v247, 0.0
  %v347 = vadd.f32 %v345, %v346
  %v348 = vsel %vm120, %v249, 0.0
  %v349 = vadd.f32 %v347, %v348
  %v350 = vsel %vm120, %v251, 0.0
  %v351 = vadd.f32 %v349, %v350
  %v352 = vsel %vm120, %v253, 0.0
  %v353 = vadd.f32 %v351, %v352
  %v354 = vsel %vm120, %v255, 0.0
  %v355 = vadd.f32 %v353, %v354
  %v356 = vrot.slane %v355, 4
  %v357 = vadd.f32 %v355, %v356
  %v358 = vrot.slane %v357, 2
  %v359 = vadd.f32 %v357, %v358
  %v360 = vrot.slane %v359, 1
  %v361 = vadd.f32 %v359, %v360
  %v362 = vmul.f32 %v292, 0.00390625
  %v363 = vmul.f32 %v361, 0.00390625
  %v364 = vmul.f32 %v190, %v190
  %v365 = vmul.f32 %v191, %v191
  %v366 = vsub.f32 %v362, %v364
  %v367 = vsub.f32 %v363, %v365
  %v368 = vmax.f32 %v366, 0.0
  %v369 = vmax.f32 %v367, 0.0
  %v370 = vsub.f32 %v19, %v190
  %v371 = vsub.f32 %v20, %v191
  %v372 = vsub.f32 %v21, %v190
  %v373 = vsub.f32 %v22, %v191
  %v374 = vsub.f32 %v23, %v190
  %v375 = vsub.f32 %v24, %v191
  %v376 = vsub.f32 %v25, %v190
  %v377 = vsub.f32 %v26, %v191
  %v378 = vsub.f32 %v27, %v190
  %v379 = vsub.f32 %v28, %v191
  %v380 = vsub.f32 %v29, %v190
  %v381 = vsub.f32 %v30, %v191
  %v382 = vsub.f32 %v31, %v190
  %v383 = vsub.f32 %v32, %v191
  %v384 = vsub.f32 %v33, %v190
  %v385 = vsub.f32 %v34, %v191
  %v386 = vsub.f32 %v35, %v190
  %v387 = vsub.f32 %v36, %v191
  %v388 = vsub.f32 %v37, %v190
  %v389 = vsub.f32 %v38, %v191
  %v390 = vsub.f32 %v39, %v190
  %v391 = vsub.f32 %v40, %v191
  %v392 = vsub.f32 %v41, %v190
  %v393 = vsub.f32 %v42, %v191
  %v394 = vsub.f32 %v43, %v190
  %v395 = vsub.f32 %v44, %v191
  %v396 = vsub.f32 %v45, %v190
  %v397 = vsub.f32 %v46, %v191
  %v398 = vsub.f32 %v47, %v190
  %v399 = vsub.f32 %v48, %v191
  %v400 = vsub.f32 %v49, %v190
  %v401 = vsub.f32 %v50, %v191
  %v402 = vsub.f32 %v51, %v190
  %v403 = vsub.f32 %v52, %v191
  %v404 = vsub.f32 %v53, %v190
  %v405 = vsub.f32 %v54, %v191
  %v406 = vsub.f32 %v55, %v190
  %v407 = vsub.f32 %v56, %v191
  %v408 = vsub.f32 %v57, %v190
  %v409 = vsub.f32 %v58, %v191
  %v410 = vsub.f32 %v59, %v190
  %v411 = vsub.f32 %v60, %v191
  %v412 = vsub.f32 %v61, %v190
  %v413 = vsub.f32 %v62, %v191
  %v414 = vsub.f32 %v63, %v190
  %v415 = vsub.f32 %v64, %v191
  %v416 = vsub.f32 %v65, %v190
  %v417 = vsub.f32 %v66, %v191
  %v418 = vsub.f32 %v67, %v190
  %v419 = vsub.f32 %v68, %v191
  %v420 = vsub.f32 %v69, %v190
  %v421 = vsub.f32 %v70, %v191
  %v422 = vsub.f32 %v71, %v190
  %v423 = vsub.f32 %v72, %v191
  %v424 = vsub.f32 %v73, %v190
  %v425 = vsub.f32 %v74, %v191
  %v426 = vsub.f32 %v75, %v190
  %v427 = vsub.f32 %v76, %v191
  %v428 = vsub.f32 %v77, %v190
  %v429 = vsub.f32 %v78, %v191
  %v430 = vsub.f32 %v79, %v190
  %v431 = vsub.f32 %v80, %v191
  %v432 = vsub.f32 %v81, %v190
  %v433 = vsub.f32 %v82, %v191
  %v434 = vadd.f32 %v368, 1e-05
  %v435 = vadd.f32 %v369, 1e-05
  %v436 = vrsqrt.pop %v434
  %v437 = vrsqrt.pop %v435
  %v438 = vmul.f32 %v370, %v436
  %v439 = vmul.f32 %v371, %v437
  %v440 = vmul.f32 %v372, %v436
  %v441 = vmul.f32 %v373, %v437
  %v442 = vmul.f32 %v374, %v436
  %v443 = vmul.f32 %v375, %v437
  %v444 = vmul.f32 %v376, %v436
  %v445 = vmul.f32 %v377, %v437
  %v446 = vmul.f32 %v378, %v436
  %v447 = vmul.f32 %v379, %v437
  %v448 = vmul.f32 %v380, %v436
  %v449 = vmul.f32 %v381, %v437
  %v450 = vmul.f32 %v382, %v436
  %v451 = vmul.f32 %v383, %v437
  %v452 = vmul.f32 %v384, %v436
  %v453 = vmul.f32 %v385, %v437
  %v454 = vmul.f32 %v386, %v436
  %v455 = vmul.f32 %v387, %v437
  %v456 = vmul.f32 %v388, %v436
  %v457 = vmul.f32 %v389, %v437
  %v458 = vmul.f32 %v390, %v436
  %v459 = vmul.f32 %v391, %v437
  %v460 = vmul.f32 %v392, %v436
  %v461 = vmul.f32 %v393, %v437
  %v462 = vmul.f32 %v394, %v436
  %v463 = vmul.f32 %v395, %v437
  %v464 = vmul.f32 %v396, %v436
  %v465 = vmul.f32 %v397, %v437
  %v466 = vmul.f32 %v398, %v436
  %v467 = vmul.f32 %v399, %v437
  %v468 = vmul.f32 %v400, %v436
  %v469 = vmul.f32 %v401, %v437
  %v470 = vmul.f32 %v402, %v436
  %v471 = vmul.f32 %v403, %v437
  %v472 = vmul.f32 %v404, %v436
  %v473 = vmul.f32 %v405, %v437
  %v474 = vmul.f32 %v406, %v436
  %v475 = vmul.f32 %v407, %v437
  %v476 = vmul.f32 %v408, %v436
  %v477 = vmul.f32 %v409, %v437
  %v478 = vmul.f32 %v410, %v436
  %v479 = vmul.f32 %v411, %v437
  %v480 = vmul.f32 %v412, %v436
  %v481 = vmul.f32 %v413, %v437
  %v482 = vmul.f32 %v414, %v436
  %v483 = vmul.f32 %v415, %v437
  %v484 = vmul.f32 %v416, %v436
  %v485 = vmul.f32 %v417, %v437
  %v486 = vmul.f32 %v418, %v436
  %v487 = vmul.f32 %v419, %v437
  %v488 = vmul.f32 %v420, %v436
  %v489 = vmul.f32 %v421, %v437
  %v490 = vmul.f32 %v422, %v436
  %v491 = vmul.f32 %v423, %v437
  %v492 = vmul.f32 %v424, %v436
  %v493 = vmul.f32 %v425, %v437
  %v494 = vmul.f32 %v426, %v436
  %v495 = vmul.f32 %v427, %v437
  %v496 = vmul.f32 %v428, %v436
  %v497 = vmul.f32 %v429, %v437
  %v498 = vmul.f32 %v430, %v436
  %v499 = vmul.f32 %v431, %v437
  %v500 = vmul.f32 %v432, %v436
  %v501 = vmul.f32 %v433, %v437
  %v502 = vpack.c.bf16 %v440, %v438
  %v503 = vpack.c.bf16 %v441, %v439
  %v504 = vpack.c.bf16 %v444, %v442
  %v505 = vpack.c.bf16 %v445, %v443
  %v506 = vpack.c.bf16 %v448, %v446
  %v507 = vpack.c.bf16 %v449, %v447
  %v508 = vpack.c.bf16 %v452, %v450
  %v509 = vpack.c.bf16 %v453, %v451
  %v510 = vpack.c.bf16 %v456, %v454
  %v511 = vpack.c.bf16 %v457, %v455
  %v512 = vpack.c.bf16 %v460, %v458
  %v513 = vpack.c.bf16 %v461, %v459
  %v514 = vpack.c.bf16 %v464, %v462
  %v515 = vpack.c.bf16 %v465, %v463
  %v516 = vpack.c.bf16 %v468, %v466
  %v517 = vpack.c.bf16 %v469, %v467
  %v518 = vpack.c.bf16 %v472, %v470
  %v519 = vpack.c.bf16 %v473, %v471
  %v520 = vpack.c.bf16 %v476, %v474
  %v521 = vpack.c.bf16 %v477, %v475
  %v522 = vpack.c.bf16 %v480, %v478
  %v523 = vpack.c.bf16 %v481, %v479
  %v524 = vpack.c.bf16 %v484, %v482
  %v525 = vpack.c.bf16 %v485, %v483
  %v526 = vpack.c.bf16 %v488, %v486
  %v527 = vpack.c.bf16 %v489, %v487
  %v528 = vpack.c.bf16 %v492, %v490
  %v529 = vpack.c.bf16 %v493, %v491
  %v530 = vpack.c.bf16 %v496, %v494
  %v531 = vpack.c.bf16 %v497, %v495
  %v532 = vpack.c.bf16 %v500, %v498
  %v533 = vpack.c.bf16 %v501, %v499
  %v534 = vld [vmem:[%s1] sm:$0xf]
  %v535 = vld [vmem:[%s1 + $0x4] sm:$0xf]
  %v536 = vld [vmem:[%s1 + $0x8] sm:$0xf]
  %v537 = vld [vmem:[%s1 + $0xc] sm:$0xf]
  %v538 = vld [vmem:[%s1 + $0x10] sm:$0xf]
  %v539 = vld [vmem:[%s1 + $0x14] sm:$0xf]
  %v540 = vld [vmem:[%s1 + $0x18] sm:$0xf]
  %v541 = vld [vmem:[%s1 + $0x1c] sm:$0xf]
  %v542 = vld [vmem:[%s1 + $0x20] sm:$0xf]
  %v543 = vld [vmem:[%s1 + $0x24] sm:$0xf]
  %v544 = vld [vmem:[%s1 + $0x28] sm:$0xf]
  %v545 = vld [vmem:[%s1 + $0x2c] sm:$0xf]
  %v546 = vld [vmem:[%s1 + $0x30] sm:$0xf]
  %v547 = vld [vmem:[%s1 + $0x34] sm:$0xf]
  %v548 = vld [vmem:[%s1 + $0x38] sm:$0xf]
  %v549 = vld [vmem:[%s1 + $0x3c] sm:$0xf]
  %v550 = vld [vmem:[%s1 + $0x40] sm:$0xf]
  %v551 = vld [vmem:[%s1 + $0x44] sm:$0xf]
  %v552 = vld [vmem:[%s1 + $0x48] sm:$0xf]
  %v553 = vld [vmem:[%s1 + $0x4c] sm:$0xf]
  %v554 = vld [vmem:[%s1 + $0x50] sm:$0x3]
  %v555 = vlaneseq
  %v556 = vshrl.u32 %v555, 7
  %v557 = vsub.s32 0, %v556
  %v558 = vrot.slane %v18, %v557
  %v580 = vunpack.c.l.b16 %v534
  %v581 = vunpack.c.l.b16 %v535
  %v582 = vunpack.c.l.b16 %v536
  %v583 = vunpack.c.l.b16 %v537
  %v584 = vunpack.c.l.b16 %v538
  %v585 = vunpack.c.l.b16 %v539
  %v586 = vunpack.c.l.b16 %v540
  %v587 = vunpack.c.l.b16 %v541
  %v588 = vunpack.c.l.b16 %v542
  %v589 = vunpack.c.l.b16 %v543
  %v590 = vunpack.c.l.b16 %v544
  %v591 = vunpack.c.l.b16 %v545
  %v592 = vunpack.c.l.b16 %v546
  %v593 = vunpack.c.l.b16 %v547
  %v594 = vunpack.c.l.b16 %v548
  %v595 = vunpack.c.l.b16 %v549
  %v596 = vunpack.c.l.b16 %v550
  %v597 = vunpack.c.l.b16 %v551
  %v598 = vunpack.c.l.b16 %v552
  %v599 = vunpack.c.l.b16 %v553
  %v600 = vunpack.c.l.b16 %v554
  %v601 = vpack.c.b16 %v581, %v580
  %v602 = vpack.c.b16 %v583, %v582
  %v603 = vpack.c.b16 %v585, %v584
  %v604 = vpack.c.b16 %v587, %v586
  %v605 = vpack.c.b16 %v589, %v588
  %v606 = vpack.c.b16 %v591, %v590
  %v607 = vpack.c.b16 %v593, %v592
  %v608 = vpack.c.b16 %v595, %v594
  %v609 = vpack.c.b16 %v597, %v596
  %v610 = vpack.c.b16 %v599, %v598
  %v611 = vpack.c.b16 %v600, %v600
  %v623 = vsel %vm120, %v503, 0
  %v626 = vsel %vm120, %v505, 0
  %v629 = vsel %vm120, %v507, 0
  %v632 = vsel %vm120, %v509, 0
  %v635 = vsel %vm120, %v511, 0
  %v638 = vsel %vm120, %v513, 0
  %v641 = vsel %vm120, %v515, 0
  %v644 = vsel %vm120, %v517, 0
  %v647 = vsel %vm120, %v519, 0
  %v650 = vsel %vm120, %v521, 0
  %v653 = vsel %vm120, %v523, 0
  %v656 = vsel %vm120, %v525, 0
  %v659 = vsel %vm120, %v527, 0
  %v662 = vsel %vm120, %v529, 0
  %v665 = vsel %vm120, %v531, 0
  %v668 = vsel %vm120, %v533, 0
  %vm670 = vcmask 1040384
  %vm671 = vcmask 1041408
  %v672 = vsel %vm670, 4294967295, 65535
  %v673 = vsel %vm671, %v672, 0
  %v675 = vand.u32 %v611, %v673
  %677 = vmatprep.subr.bf16.mxu0 0
  %678 = vmatpush1.bf16.msra.mxu0 %v608
  %679 = vmatprep.subr.bf16.mxu0 0
  %680 = vmatpush1.bf16.msra.mxu0 %v607
  %681 = vmatprep.subr.bf16.mxu0 0
  %682 = vmatpush1.bf16.msra.mxu0 %v606
  %683 = vmatprep.subr.bf16.mxu0 0
  %684 = vmatpush1.bf16.msra.mxu0 %v605
  %685 = vmatprep.subr.bf16.mxu0 0
  %686 = vmatpush1.bf16.msra.mxu0 %v604
  %687 = vmatprep.subr.bf16.mxu0 0
  %688 = vmatpush1.bf16.msra.mxu0 %v603
  %689 = vmatprep.subr.bf16.mxu0 0
  %690 = vmatpush1.bf16.msra.mxu0 %v602
  %691 = vmatprep.subr.bf16.mxu0 0
  %692 = vmatpush1.bf16.msra.mxu0 %v601
  %693 = vmatprep.subr.bf16.mxu0 0
  %694 = vmatpush2.bf16.msra.mxu0 0
  %695 = vmatprep.subr.bf16.mxu0 0
  %696 = vmatpush2.bf16.msra.mxu0 0
  %697 = vmatprep.subr.bf16.mxu0 0
  %698 = vmatpush2.bf16.msra.mxu0 0
  %699 = vmatprep.subr.bf16.mxu0 0
  %700 = vmatpush2.bf16.msra.mxu0 0
  %701 = vmatprep.subr.bf16.mxu0 0
  %702 = vmatpush2.bf16.msra.mxu0 0
  %703 = vmatprep.subr.bf16.mxu0 0
  %704 = vmatpush2.bf16.msra.mxu0 %v675
  %705 = vmatprep.subr.bf16.mxu0 0
  %706 = vmatpush2.bf16.msra.mxu0 %v610
  %707 = vmatprep.subr.bf16.mxu0 0
  %708 = vmatpush2.bf16.msra.mxu0 %v609
  %709 = vmatprep.mubr.bf16.mxu0 %v623
  %710 = vmatmul.mubr.bf16.gmra.mxu0 %v502
  %v711 = vpop.f32.mrf.mxu0
  %v712 = vadd.f32 %v558, %v711
  %v713 = vpop.f32.mrf.mxu0
  %v714 = vpop.f32.mrf.mxu0
  %v715 = vadd.f32 %v558, %v714
  %v716 = vpop.f32.mrf.mxu0
  %717 = vmatprep.mubr.bf16.mxu0 %v626
  %718 = vmatmul.mubr.bf16.gmra.mxu0 %v504
  %v719 = vpop.f32.mrf.mxu0
  %v720 = vadd.f32 %v558, %v719
  %v721 = vpop.f32.mrf.mxu0
  %v722 = vpop.f32.mrf.mxu0
  %v723 = vadd.f32 %v558, %v722
  %v724 = vpop.f32.mrf.mxu0
  %725 = vmatprep.mubr.bf16.mxu0 %v629
  %726 = vmatmul.mubr.bf16.gmra.mxu0 %v506
  %v727 = vpop.f32.mrf.mxu0
  %v728 = vadd.f32 %v558, %v727
  %v729 = vpop.f32.mrf.mxu0
  %v730 = vpop.f32.mrf.mxu0
  %v731 = vadd.f32 %v558, %v730
  %v732 = vpop.f32.mrf.mxu0
  %733 = vmatprep.mubr.bf16.mxu0 %v632
  %734 = vmatmul.mubr.bf16.gmra.mxu0 %v508
  %v735 = vpop.f32.mrf.mxu0
  %v736 = vadd.f32 %v558, %v735
  %v737 = vpop.f32.mrf.mxu0
  %v738 = vpop.f32.mrf.mxu0
  %v739 = vadd.f32 %v558, %v738
  %v740 = vpop.f32.mrf.mxu0
  %741 = vmatprep.mubr.bf16.mxu0 %v635
  %742 = vmatmul.mubr.bf16.gmra.mxu0 %v510
  %v743 = vpop.f32.mrf.mxu0
  %v744 = vadd.f32 %v558, %v743
  %v745 = vpop.f32.mrf.mxu0
  %v746 = vpop.f32.mrf.mxu0
  %v747 = vadd.f32 %v558, %v746
  %v748 = vpop.f32.mrf.mxu0
  %749 = vmatprep.mubr.bf16.mxu0 %v638
  %750 = vmatmul.mubr.bf16.gmra.mxu0 %v512
  %v751 = vpop.f32.mrf.mxu0
  %v752 = vadd.f32 %v558, %v751
  %v753 = vpop.f32.mrf.mxu0
  %v754 = vpop.f32.mrf.mxu0
  %v755 = vadd.f32 %v558, %v754
  %v756 = vpop.f32.mrf.mxu0
  %757 = vmatprep.mubr.bf16.mxu0 %v641
  %758 = vmatmul.mubr.bf16.gmra.mxu0 %v514
  %v759 = vpop.f32.mrf.mxu0
  %v760 = vadd.f32 %v558, %v759
  %v761 = vpop.f32.mrf.mxu0
  %v762 = vpop.f32.mrf.mxu0
  %v763 = vadd.f32 %v558, %v762
  %v764 = vpop.f32.mrf.mxu0
  %765 = vmatprep.mubr.bf16.mxu0 %v644
  %766 = vmatmul.mubr.bf16.gmra.mxu0 %v516
  %v767 = vpop.f32.mrf.mxu0
  %v768 = vadd.f32 %v558, %v767
  %v769 = vpop.f32.mrf.mxu0
  %v770 = vpop.f32.mrf.mxu0
  %v771 = vadd.f32 %v558, %v770
  %v772 = vpop.f32.mrf.mxu0
  %773 = vmatprep.mubr.bf16.mxu0 %v647
  %774 = vmatmul.mubr.bf16.gmra.mxu0 %v518
  %v775 = vpop.f32.mrf.mxu0
  %v776 = vadd.f32 %v558, %v775
  %v777 = vpop.f32.mrf.mxu0
  %v778 = vpop.f32.mrf.mxu0
  %v779 = vadd.f32 %v558, %v778
  %v780 = vpop.f32.mrf.mxu0
  %781 = vmatprep.mubr.bf16.mxu0 %v650
  %782 = vmatmul.mubr.bf16.gmra.mxu0 %v520
  %v783 = vpop.f32.mrf.mxu0
  %v784 = vadd.f32 %v558, %v783
  %v785 = vpop.f32.mrf.mxu0
  %v786 = vpop.f32.mrf.mxu0
  %v787 = vadd.f32 %v558, %v786
  %v788 = vpop.f32.mrf.mxu0
  %789 = vmatprep.mubr.bf16.mxu0 %v653
  %790 = vmatmul.mubr.bf16.gmra.mxu0 %v522
  %v791 = vpop.f32.mrf.mxu0
  %v792 = vadd.f32 %v558, %v791
  %v793 = vpop.f32.mrf.mxu0
  %v794 = vpop.f32.mrf.mxu0
  %v795 = vadd.f32 %v558, %v794
  %v796 = vpop.f32.mrf.mxu0
  %797 = vmatprep.mubr.bf16.mxu0 %v656
  %798 = vmatmul.mubr.bf16.gmra.mxu0 %v524
  %v799 = vpop.f32.mrf.mxu0
  %v800 = vadd.f32 %v558, %v799
  %v801 = vpop.f32.mrf.mxu0
  %v802 = vpop.f32.mrf.mxu0
  %v803 = vadd.f32 %v558, %v802
  %v804 = vpop.f32.mrf.mxu0
  %805 = vmatprep.mubr.bf16.mxu0 %v659
  %806 = vmatmul.mubr.bf16.gmra.mxu0 %v526
  %v807 = vpop.f32.mrf.mxu0
  %v808 = vadd.f32 %v558, %v807
  %v809 = vpop.f32.mrf.mxu0
  %v810 = vpop.f32.mrf.mxu0
  %v811 = vadd.f32 %v558, %v810
  %v812 = vpop.f32.mrf.mxu0
  %813 = vmatprep.mubr.bf16.mxu0 %v662
  %814 = vmatmul.mubr.bf16.gmra.mxu0 %v528
  %v815 = vpop.f32.mrf.mxu0
  %v816 = vadd.f32 %v558, %v815
  %v817 = vpop.f32.mrf.mxu0
  %v818 = vpop.f32.mrf.mxu0
  %v819 = vadd.f32 %v558, %v818
  %v820 = vpop.f32.mrf.mxu0
  %821 = vmatprep.mubr.bf16.mxu0 %v665
  %822 = vmatmul.mubr.bf16.gmra.mxu0 %v530
  %v823 = vpop.f32.mrf.mxu0
  %v824 = vadd.f32 %v558, %v823
  %v825 = vpop.f32.mrf.mxu0
  %v826 = vpop.f32.mrf.mxu0
  %v827 = vadd.f32 %v558, %v826
  %v828 = vpop.f32.mrf.mxu0
  %829 = vmatprep.mubr.bf16.mxu0 %v668
  %830 = vmatmul.mubr.bf16.gmra.mxu0 %v532
  %v831 = vpop.f32.mrf.mxu0
  %v832 = vadd.f32 %v558, %v831
  %v833 = vpop.f32.mrf.mxu0
  %v834 = vpop.f32.mrf.mxu0
  %v835 = vadd.f32 %v558, %v834
  %v836 = vpop.f32.mrf.mxu0
  %837 = vdwg.mxu0
  %v838 = vtanh.pop %v712
  %v839 = vtanh.pop %v715
  %v840 = vtanh.pop %v720
  %v841 = vtanh.pop %v723
  %v842 = vtanh.pop %v728
  %v843 = vtanh.pop %v731
  %v844 = vtanh.pop %v736
  %v845 = vtanh.pop %v739
  %v846 = vtanh.pop %v744
  %v847 = vtanh.pop %v747
  %v848 = vtanh.pop %v752
  %v849 = vtanh.pop %v755
  %v850 = vtanh.pop %v760
  %v851 = vtanh.pop %v763
  %v852 = vtanh.pop %v768
  %v853 = vtanh.pop %v771
  %v854 = vtanh.pop %v776
  %v855 = vtanh.pop %v779
  %v856 = vtanh.pop %v784
  %v857 = vtanh.pop %v787
  %v858 = vtanh.pop %v792
  %v859 = vtanh.pop %v795
  %v860 = vtanh.pop %v800
  %v861 = vtanh.pop %v803
  %v862 = vtanh.pop %v808
  %v863 = vtanh.pop %v811
  %v864 = vtanh.pop %v816
  %v865 = vtanh.pop %v819
  %v866 = vtanh.pop %v824
  %v867 = vtanh.pop %v827
  %v868 = vtanh.pop %v832
  %v869 = vtanh.pop %v835
  %v870 = vadd.f32 %v838, %v839
  %v871 = vadd.f32 %v870, %v840
  %v872 = vadd.f32 %v871, %v841
  %v873 = vadd.f32 %v872, %v842
  %v874 = vadd.f32 %v873, %v843
  %v875 = vadd.f32 %v874, %v844
  %v876 = vadd.f32 %v875, %v845
  %v877 = vadd.f32 %v876, %v846
  %v878 = vadd.f32 %v877, %v847
  %v879 = vadd.f32 %v878, %v848
  %v880 = vadd.f32 %v879, %v849
  %v881 = vadd.f32 %v880, %v850
  %v882 = vadd.f32 %v881, %v851
  %v883 = vadd.f32 %v882, %v852
  %v884 = vadd.f32 %v883, %v853
  %v885 = vadd.f32 %v884, %v854
  %v886 = vadd.f32 %v885, %v855
  %v887 = vadd.f32 %v886, %v856
  %v888 = vadd.f32 %v887, %v857
  %v889 = vadd.f32 %v888, %v858
  %v890 = vadd.f32 %v889, %v859
  %v891 = vadd.f32 %v890, %v860
  %v892 = vadd.f32 %v891, %v861
  %v893 = vadd.f32 %v892, %v862
  %v894 = vadd.f32 %v893, %v863
  %v895 = vadd.f32 %v894, %v864
  %v896 = vadd.f32 %v895, %v865
  %v897 = vadd.f32 %v896, %v866
  %v898 = vadd.f32 %v897, %v867
  %v899 = vadd.f32 %v898, %v868
  %v900 = vadd.f32 %v899, %v869
  %v901 = vrot.slane %v900, 4
  %v902 = vadd.f32 %v900, %v901
  %v903 = vrot.slane %v902, 2
  %v904 = vadd.f32 %v902, %v903
  %v905 = vrot.slane %v904, 1
  %v906 = vadd.f32 %v904, %v905
  %v907 = vmul.f32 %v906, 0.00390625
  %v908 = vmul.f32 %v838, %v838
  %v909 = vmul.f32 %v839, %v839
  %v910 = vmul.f32 %v840, %v840
  %v911 = vmul.f32 %v841, %v841
  %v912 = vmul.f32 %v842, %v842
  %v913 = vmul.f32 %v843, %v843
  %v914 = vmul.f32 %v844, %v844
  %v915 = vmul.f32 %v845, %v845
  %v916 = vmul.f32 %v846, %v846
  %v917 = vmul.f32 %v847, %v847
  %v918 = vmul.f32 %v848, %v848
  %v919 = vmul.f32 %v849, %v849
  %v920 = vmul.f32 %v850, %v850
  %v921 = vmul.f32 %v851, %v851
  %v922 = vmul.f32 %v852, %v852
  %v923 = vmul.f32 %v853, %v853
  %v924 = vmul.f32 %v854, %v854
  %v925 = vmul.f32 %v855, %v855
  %v926 = vmul.f32 %v856, %v856
  %v927 = vmul.f32 %v857, %v857
  %v928 = vmul.f32 %v858, %v858
  %v929 = vmul.f32 %v859, %v859
  %v930 = vmul.f32 %v860, %v860
  %v931 = vmul.f32 %v861, %v861
  %v932 = vmul.f32 %v862, %v862
  %v933 = vmul.f32 %v863, %v863
  %v934 = vmul.f32 %v864, %v864
  %v935 = vmul.f32 %v865, %v865
  %v936 = vmul.f32 %v866, %v866
  %v937 = vmul.f32 %v867, %v867
  %v938 = vmul.f32 %v868, %v868
  %v939 = vmul.f32 %v869, %v869
  %v940 = vadd.f32 %v908, %v909
  %v941 = vadd.f32 %v940, %v910
  %v942 = vadd.f32 %v941, %v911
  %v943 = vadd.f32 %v942, %v912
  %v944 = vadd.f32 %v943, %v913
  %v945 = vadd.f32 %v944, %v914
  %v946 = vadd.f32 %v945, %v915
  %v947 = vadd.f32 %v946, %v916
  %v948 = vadd.f32 %v947, %v917
  %v949 = vadd.f32 %v948, %v918
  %v950 = vadd.f32 %v949, %v919
  %v951 = vadd.f32 %v950, %v920
  %v952 = vadd.f32 %v951, %v921
  %v953 = vadd.f32 %v952, %v922
  %v954 = vadd.f32 %v953, %v923
  %v955 = vadd.f32 %v954, %v924
  %v956 = vadd.f32 %v955, %v925
  %v957 = vadd.f32 %v956, %v926
  %v958 = vadd.f32 %v957, %v927
  %v959 = vadd.f32 %v958, %v928
  %v960 = vadd.f32 %v959, %v929
  %v961 = vadd.f32 %v960, %v930
  %v962 = vadd.f32 %v961, %v931
  %v963 = vadd.f32 %v962, %v932
  %v964 = vadd.f32 %v963, %v933
  %v965 = vadd.f32 %v964, %v934
  %v966 = vadd.f32 %v965, %v935
  %v967 = vadd.f32 %v966, %v936
  %v968 = vadd.f32 %v967, %v937
  %v969 = vadd.f32 %v968, %v938
  %v970 = vadd.f32 %v969, %v939
  %v971 = vrot.slane %v970, 4
  %v972 = vadd.f32 %v970, %v971
  %v973 = vrot.slane %v972, 2
  %v974 = vadd.f32 %v972, %v973
  %v975 = vrot.slane %v974, 1
  %v976 = vadd.f32 %v974, %v975
  %v977 = vmul.f32 %v976, 0.00390625
  %v978 = vmul.f32 %v907, %v907
  %v979 = vsub.f32 %v977, %v978
  %v980 = vmax.f32 %v979, 0.0
  %v981 = vsub.f32 %v838, %v907
  %v982 = vsub.f32 %v839, %v907
  %v983 = vsub.f32 %v840, %v907
  %v984 = vsub.f32 %v841, %v907
  %v985 = vsub.f32 %v842, %v907
  %v986 = vsub.f32 %v843, %v907
  %v987 = vsub.f32 %v844, %v907
  %v988 = vsub.f32 %v845, %v907
  %v989 = vsub.f32 %v846, %v907
  %v990 = vsub.f32 %v847, %v907
  %v991 = vsub.f32 %v848, %v907
  %v992 = vsub.f32 %v849, %v907
  %v993 = vsub.f32 %v850, %v907
  %v994 = vsub.f32 %v851, %v907
  %v995 = vsub.f32 %v852, %v907
  %v996 = vsub.f32 %v853, %v907
  %v997 = vsub.f32 %v854, %v907
  %v998 = vsub.f32 %v855, %v907
  %v999 = vsub.f32 %v856, %v907
  %v1000 = vsub.f32 %v857, %v907
  %v1001 = vsub.f32 %v858, %v907
  %v1002 = vsub.f32 %v859, %v907
  %v1003 = vsub.f32 %v860, %v907
  %v1004 = vsub.f32 %v861, %v907
  %v1005 = vsub.f32 %v862, %v907
  %v1006 = vsub.f32 %v863, %v907
  %v1007 = vsub.f32 %v864, %v907
  %v1008 = vsub.f32 %v865, %v907
  %v1009 = vsub.f32 %v866, %v907
  %v1010 = vsub.f32 %v867, %v907
  %v1011 = vsub.f32 %v868, %v907
  %v1012 = vsub.f32 %v869, %v907
  %v1013 = vadd.f32 %v980, 1e-05
  %v1014 = vrsqrt.pop %v1013
  %v1015 = vmul.f32 %v981, %v1014
  %v1016 = vmul.f32 %v982, %v1014
  %v1017 = vmul.f32 %v983, %v1014
  %v1018 = vmul.f32 %v984, %v1014
  %v1019 = vmul.f32 %v985, %v1014
  %v1020 = vmul.f32 %v986, %v1014
  %v1021 = vmul.f32 %v987, %v1014
  %v1022 = vmul.f32 %v988, %v1014
  %v1023 = vmul.f32 %v989, %v1014
  %v1024 = vmul.f32 %v990, %v1014
  %v1025 = vmul.f32 %v991, %v1014
  %v1026 = vmul.f32 %v992, %v1014
  %v1027 = vmul.f32 %v993, %v1014
  %v1028 = vmul.f32 %v994, %v1014
  %v1029 = vmul.f32 %v995, %v1014
  %v1030 = vmul.f32 %v996, %v1014
  %v1031 = vmul.f32 %v997, %v1014
  %v1032 = vmul.f32 %v998, %v1014
  %v1033 = vmul.f32 %v999, %v1014
  %v1034 = vmul.f32 %v1000, %v1014
  %v1035 = vmul.f32 %v1001, %v1014
  %v1036 = vmul.f32 %v1002, %v1014
  %v1037 = vmul.f32 %v1003, %v1014
  %v1038 = vmul.f32 %v1004, %v1014
  %v1039 = vmul.f32 %v1005, %v1014
  %v1040 = vmul.f32 %v1006, %v1014
  %v1041 = vmul.f32 %v1007, %v1014
  %v1042 = vmul.f32 %v1008, %v1014
  %v1043 = vmul.f32 %v1009, %v1014
  %v1044 = vmul.f32 %v1010, %v1014
  %v1045 = vmul.f32 %v1011, %v1014
  %v1046 = vmul.f32 %v1012, %v1014
  %v1047 = vpack.c.bf16 %v1016, %v1015
  %v1048 = vpack.c.bf16 %v1018, %v1017
  %v1049 = vpack.c.bf16 %v1020, %v1019
  %v1050 = vpack.c.bf16 %v1022, %v1021
  %v1051 = vpack.c.bf16 %v1024, %v1023
  %v1052 = vpack.c.bf16 %v1026, %v1025
  %v1053 = vpack.c.bf16 %v1028, %v1027
  %v1054 = vpack.c.bf16 %v1030, %v1029
  %v1055 = vpack.c.bf16 %v1032, %v1031
  %v1056 = vpack.c.bf16 %v1034, %v1033
  %v1057 = vpack.c.bf16 %v1036, %v1035
  %v1058 = vpack.c.bf16 %v1038, %v1037
  %v1059 = vpack.c.bf16 %v1040, %v1039
  %v1060 = vpack.c.bf16 %v1042, %v1041
  %v1061 = vpack.c.bf16 %v1044, %v1043
  %v1062 = vpack.c.bf16 %v1046, %v1045
  %v1063 = vld [vmem:[%s3] sm:$0xf]
  %v1064 = vld [vmem:[%s3 + $0x4] sm:$0xf]
  %v1065 = vld [vmem:[%s3 + $0x8] sm:$0xf]
  %v1066 = vld [vmem:[%s3 + $0xc] sm:$0xf]
  %v1067 = vld [vmem:[%s3 + $0x10] sm:$0xf]
  %v1068 = vld [vmem:[%s3 + $0x14] sm:$0xf]
  %v1069 = vld [vmem:[%s3 + $0x18] sm:$0xf]
  %v1070 = vld [vmem:[%s3 + $0x1c] sm:$0xf]
  %v1071 = vld [vmem:[%s3 + $0x20] sm:$0xf]
  %v1072 = vld [vmem:[%s3 + $0x24] sm:$0xf]
  %v1073 = vld [vmem:[%s3 + $0x28] sm:$0xf]
  %v1074 = vld [vmem:[%s3 + $0x2c] sm:$0xf]
  %v1075 = vld [vmem:[%s3 + $0x30] sm:$0xf]
  %v1076 = vld [vmem:[%s3 + $0x34] sm:$0xf]
  %v1077 = vld [vmem:[%s3 + $0x38] sm:$0xf]
  %v1078 = vld [vmem:[%s3 + $0x3c] sm:$0xf]
  %v1079 = vlaneseq
  %v1080 = vshrl.u32 %v1079, 7
  %v1081 = vsub.s32 1, %v1080
  %v1082 = vrot.slane %v18, %v1081
  %v1099 = vunpack.c.l.b16 %v1063
  %v1100 = vunpack.c.l.b16 %v1064
  %v1101 = vunpack.c.l.b16 %v1065
  %v1102 = vunpack.c.l.b16 %v1066
  %v1103 = vunpack.c.l.b16 %v1067
  %v1104 = vunpack.c.l.b16 %v1068
  %v1105 = vunpack.c.l.b16 %v1069
  %v1106 = vunpack.c.l.b16 %v1070
  %v1107 = vunpack.c.l.b16 %v1071
  %v1108 = vunpack.c.l.b16 %v1072
  %v1109 = vunpack.c.l.b16 %v1073
  %v1110 = vunpack.c.l.b16 %v1074
  %v1111 = vunpack.c.l.b16 %v1075
  %v1112 = vunpack.c.l.b16 %v1076
  %v1113 = vunpack.c.l.b16 %v1077
  %v1114 = vunpack.c.l.b16 %v1078
  %v1115 = vpack.c.b16 %v1100, %v1099
  %v1116 = vpack.c.b16 %v1102, %v1101
  %v1117 = vpack.c.b16 %v1104, %v1103
  %v1118 = vpack.c.b16 %v1106, %v1105
  %v1119 = vpack.c.b16 %v1108, %v1107
  %v1120 = vpack.c.b16 %v1110, %v1109
  %v1121 = vpack.c.b16 %v1112, %v1111
  %v1122 = vpack.c.b16 %v1114, %v1113
  %1131 = vmatprep.subr.bf16.mxu0 0
  %1132 = vmatpush1.bf16.msra.mxu0 %v1122
  %1133 = vmatprep.subr.bf16.mxu0 0
  %1134 = vmatpush1.bf16.msra.mxu0 %v1121
  %1135 = vmatprep.subr.bf16.mxu0 0
  %1136 = vmatpush1.bf16.msra.mxu0 %v1120
  %1137 = vmatprep.subr.bf16.mxu0 0
  %1138 = vmatpush1.bf16.msra.mxu0 %v1119
  %1139 = vmatprep.subr.bf16.mxu0 0
  %1140 = vmatpush1.bf16.msra.mxu0 %v1118
  %1141 = vmatprep.subr.bf16.mxu0 0
  %1142 = vmatpush1.bf16.msra.mxu0 %v1117
  %1143 = vmatprep.subr.bf16.mxu0 0
  %1144 = vmatpush1.bf16.msra.mxu0 %v1116
  %1145 = vmatprep.subr.bf16.mxu0 0
  %1146 = vmatpush1.bf16.msra.mxu0 %v1115
  %1147 = vmatprep.subr.bf16.mxu0 0
  %1148 = vmatpush2.bf16.msra.mxu0 0
  %1149 = vmatprep.subr.bf16.mxu0 0
  %1150 = vmatpush2.bf16.msra.mxu0 0
  %1151 = vmatprep.subr.bf16.mxu0 0
  %1152 = vmatpush2.bf16.msra.mxu0 0
  %1153 = vmatprep.subr.bf16.mxu0 0
  %1154 = vmatpush2.bf16.msra.mxu0 0
  %1155 = vmatprep.subr.bf16.mxu0 0
  %1156 = vmatpush2.bf16.msra.mxu0 0
  %1157 = vmatprep.subr.bf16.mxu0 0
  %1158 = vmatpush2.bf16.msra.mxu0 0
  %1159 = vmatprep.subr.bf16.mxu0 0
  %1160 = vmatpush2.bf16.msra.mxu0 0
  %1161 = vmatprep.subr.bf16.mxu0 0
  %1162 = vmatpush2.bf16.msra.mxu0 0
  %1163 = vmatprep.mubr.bf16.mxu0 0
  %1164 = vmatmul.mubr.bf16.gmra.mxu0 %v1047
  %v1165 = vpop.f32.mrf.mxu0
  %v1166 = vadd.f32 %v1082, %v1165
  %v1167 = vpop.f32.mrf.mxu0
  %v1168 = vpop.f32.mrf.mxu0
  %v1169 = vadd.f32 %v1082, %v1168
  %v1170 = vpop.f32.mrf.mxu0
  %1171 = vmatprep.mubr.bf16.mxu0 0
  %1172 = vmatmul.mubr.bf16.gmra.mxu0 %v1048
  %v1173 = vpop.f32.mrf.mxu0
  %v1174 = vadd.f32 %v1082, %v1173
  %v1175 = vpop.f32.mrf.mxu0
  %v1176 = vpop.f32.mrf.mxu0
  %v1177 = vadd.f32 %v1082, %v1176
  %v1178 = vpop.f32.mrf.mxu0
  %1179 = vmatprep.mubr.bf16.mxu0 0
  %1180 = vmatmul.mubr.bf16.gmra.mxu0 %v1049
  %v1181 = vpop.f32.mrf.mxu0
  %v1182 = vadd.f32 %v1082, %v1181
  %v1183 = vpop.f32.mrf.mxu0
  %v1184 = vpop.f32.mrf.mxu0
  %v1185 = vadd.f32 %v1082, %v1184
  %v1186 = vpop.f32.mrf.mxu0
  %1187 = vmatprep.mubr.bf16.mxu0 0
  %1188 = vmatmul.mubr.bf16.gmra.mxu0 %v1050
  %v1189 = vpop.f32.mrf.mxu0
  %v1190 = vadd.f32 %v1082, %v1189
  %v1191 = vpop.f32.mrf.mxu0
  %v1192 = vpop.f32.mrf.mxu0
  %v1193 = vadd.f32 %v1082, %v1192
  %v1194 = vpop.f32.mrf.mxu0
  %1195 = vmatprep.mubr.bf16.mxu0 0
  %1196 = vmatmul.mubr.bf16.gmra.mxu0 %v1051
  %v1197 = vpop.f32.mrf.mxu0
  %v1198 = vadd.f32 %v1082, %v1197
  %v1199 = vpop.f32.mrf.mxu0
  %v1200 = vpop.f32.mrf.mxu0
  %v1201 = vadd.f32 %v1082, %v1200
  %v1202 = vpop.f32.mrf.mxu0
  %1203 = vmatprep.mubr.bf16.mxu0 0
  %1204 = vmatmul.mubr.bf16.gmra.mxu0 %v1052
  %v1205 = vpop.f32.mrf.mxu0
  %v1206 = vadd.f32 %v1082, %v1205
  %v1207 = vpop.f32.mrf.mxu0
  %v1208 = vpop.f32.mrf.mxu0
  %v1209 = vadd.f32 %v1082, %v1208
  %v1210 = vpop.f32.mrf.mxu0
  %1211 = vmatprep.mubr.bf16.mxu0 0
  %1212 = vmatmul.mubr.bf16.gmra.mxu0 %v1053
  %v1213 = vpop.f32.mrf.mxu0
  %v1214 = vadd.f32 %v1082, %v1213
  %v1215 = vpop.f32.mrf.mxu0
  %v1216 = vpop.f32.mrf.mxu0
  %v1217 = vadd.f32 %v1082, %v1216
  %v1218 = vpop.f32.mrf.mxu0
  %1219 = vmatprep.mubr.bf16.mxu0 0
  %1220 = vmatmul.mubr.bf16.gmra.mxu0 %v1054
  %v1221 = vpop.f32.mrf.mxu0
  %v1222 = vadd.f32 %v1082, %v1221
  %v1223 = vpop.f32.mrf.mxu0
  %v1224 = vpop.f32.mrf.mxu0
  %v1225 = vadd.f32 %v1082, %v1224
  %v1226 = vpop.f32.mrf.mxu0
  %1227 = vmatprep.mubr.bf16.mxu0 0
  %1228 = vmatmul.mubr.bf16.gmra.mxu0 %v1055
  %v1229 = vpop.f32.mrf.mxu0
  %v1230 = vadd.f32 %v1082, %v1229
  %v1231 = vpop.f32.mrf.mxu0
  %v1232 = vpop.f32.mrf.mxu0
  %v1233 = vadd.f32 %v1082, %v1232
  %v1234 = vpop.f32.mrf.mxu0
  %1235 = vmatprep.mubr.bf16.mxu0 0
  %1236 = vmatmul.mubr.bf16.gmra.mxu0 %v1056
  %v1237 = vpop.f32.mrf.mxu0
  %v1238 = vadd.f32 %v1082, %v1237
  %v1239 = vpop.f32.mrf.mxu0
  %v1240 = vpop.f32.mrf.mxu0
  %v1241 = vadd.f32 %v1082, %v1240
  %v1242 = vpop.f32.mrf.mxu0
  %1243 = vmatprep.mubr.bf16.mxu0 0
  %1244 = vmatmul.mubr.bf16.gmra.mxu0 %v1057
  %v1245 = vpop.f32.mrf.mxu0
  %v1246 = vadd.f32 %v1082, %v1245
  %v1247 = vpop.f32.mrf.mxu0
  %v1248 = vpop.f32.mrf.mxu0
  %v1249 = vadd.f32 %v1082, %v1248
  %v1250 = vpop.f32.mrf.mxu0
  %1251 = vmatprep.mubr.bf16.mxu0 0
  %1252 = vmatmul.mubr.bf16.gmra.mxu0 %v1058
  %v1253 = vpop.f32.mrf.mxu0
  %v1254 = vadd.f32 %v1082, %v1253
  %v1255 = vpop.f32.mrf.mxu0
  %v1256 = vpop.f32.mrf.mxu0
  %v1257 = vadd.f32 %v1082, %v1256
  %v1258 = vpop.f32.mrf.mxu0
  %1259 = vmatprep.mubr.bf16.mxu0 0
  %1260 = vmatmul.mubr.bf16.gmra.mxu0 %v1059
  %v1261 = vpop.f32.mrf.mxu0
  %v1262 = vadd.f32 %v1082, %v1261
  %v1263 = vpop.f32.mrf.mxu0
  %v1264 = vpop.f32.mrf.mxu0
  %v1265 = vadd.f32 %v1082, %v1264
  %v1266 = vpop.f32.mrf.mxu0
  %1267 = vmatprep.mubr.bf16.mxu0 0
  %1268 = vmatmul.mubr.bf16.gmra.mxu0 %v1060
  %v1269 = vpop.f32.mrf.mxu0
  %v1270 = vadd.f32 %v1082, %v1269
  %v1271 = vpop.f32.mrf.mxu0
  %v1272 = vpop.f32.mrf.mxu0
  %v1273 = vadd.f32 %v1082, %v1272
  %v1274 = vpop.f32.mrf.mxu0
  %1275 = vmatprep.mubr.bf16.mxu0 0
  %1276 = vmatmul.mubr.bf16.gmra.mxu0 %v1061
  %v1277 = vpop.f32.mrf.mxu0
  %v1278 = vadd.f32 %v1082, %v1277
  %v1279 = vpop.f32.mrf.mxu0
  %v1280 = vpop.f32.mrf.mxu0
  %v1281 = vadd.f32 %v1082, %v1280
  %v1282 = vpop.f32.mrf.mxu0
  %1283 = vmatprep.mubr.bf16.mxu0 0
  %1284 = vmatmul.mubr.bf16.gmra.mxu0 %v1062
  %v1285 = vpop.f32.mrf.mxu0
  %v1286 = vadd.f32 %v1082, %v1285
  %v1287 = vpop.f32.mrf.mxu0
  %v1288 = vpop.f32.mrf.mxu0
  %v1289 = vadd.f32 %v1082, %v1288
  %v1290 = vpop.f32.mrf.mxu0
  %1291 = vdwg.mxu0
  %1292 = vst [vmem:[%s4] sm:$0xff] %v1166
  %1293 = vst [vmem:[%s4 + $0x8] sm:$0xff] %v1169
  %1294 = vst [vmem:[%s4 + $0x10] sm:$0xff] %v1174
  %1295 = vst [vmem:[%s4 + $0x18] sm:$0xff] %v1177
  %1296 = vst [vmem:[%s4 + $0x20] sm:$0xff] %v1182
  %1297 = vst [vmem:[%s4 + $0x28] sm:$0xff] %v1185
  %1298 = vst [vmem:[%s4 + $0x30] sm:$0xff] %v1190
  %1299 = vst [vmem:[%s4 + $0x38] sm:$0xff] %v1193
  %1300 = vst [vmem:[%s4 + $0x40] sm:$0xff] %v1198
  %1301 = vst [vmem:[%s4 + $0x48] sm:$0xff] %v1201
  %1302 = vst [vmem:[%s4 + $0x50] sm:$0xff] %v1206
  %1303 = vst [vmem:[%s4 + $0x58] sm:$0xff] %v1209
  %1304 = vst [vmem:[%s4 + $0x60] sm:$0xff] %v1214
  %1305 = vst [vmem:[%s4 + $0x68] sm:$0xff] %v1217
  %1306 = vst [vmem:[%s4 + $0x70] sm:$0xff] %v1222
  %1307 = vst [vmem:[%s4 + $0x78] sm:$0xff] %v1225
  %1308 = vst [vmem:[%s4 + $0x80] sm:$0xff] %v1230
  %1309 = vst [vmem:[%s4 + $0x88] sm:$0xff] %v1233
  %1310 = vst [vmem:[%s4 + $0x90] sm:$0xff] %v1238
  %1311 = vst [vmem:[%s4 + $0x98] sm:$0xff] %v1241
  %1312 = vst [vmem:[%s4 + $0xa0] sm:$0xff] %v1246
  %1313 = vst [vmem:[%s4 + $0xa8] sm:$0xff] %v1249
  %1314 = vst [vmem:[%s4 + $0xb0] sm:$0xff] %v1254
  %1315 = vst [vmem:[%s4 + $0xb8] sm:$0xff] %v1257
  %1316 = vst [vmem:[%s4 + $0xc0] sm:$0xff] %v1262
  %1317 = vst [vmem:[%s4 + $0xc8] sm:$0xff] %v1265
  %1318 = vst [vmem:[%s4 + $0xd0] sm:$0xff] %v1270
  %1319 = vst [vmem:[%s4 + $0xd8] sm:$0xff] %v1273
  %1320 = vst [vmem:[%s4 + $0xe0] sm:$0xff] %v1278
  %1321 = vst [vmem:[%s4 + $0xe8] sm:$0xff] %v1281
  %1322 = vst [vmem:[%s4 + $0xf0] sm:$0xff] %v1286
  %1323 = vst [vmem:[%s4 + $0xf8] sm:$0xff] %v1289
  // Predicated region
  $region18: #{forward.1} parent=0 // pred_check
    _
  $region19: #{forward.1} parent=0 // pred_check_branch
    %1325 = sbr.rel (0) target = $region21
  $region20: #{forward.1} parent=0 // pred_region
    _
  $region21: #{forward.1} parent=0 // pred_fallthru
    _
  // Predicated region
  $region22: #{forward.1} parent=0 // pred_check
    _
  $region23: #{forward.1} parent=0 // pred_check_branch
    %1327 = sbr.rel (0) target = $region25
  $region24: #{forward.1} parent=0 // pred_region
    _
  $region25: #{forward.1} parent=0 // pred_fallthru
    _

</llo_original>
